<compile_context>
chip_gen: v7x
topology: tpu7x:2x2x1
jax: 0.10.0
libtpu: 0.0.40
codegen_flags: <defaults>
</compile_context>

<pallas_src>
import math

import jax
import jax.numpy as jnp
from jax.experimental import pallas as pl
from jax.experimental.pallas import tpu as pltpu


def _round_up(n: int, m: int) -> int:
    return ((n + m - 1) // m) * m


def _block_diag(w, pack: int):
    """[k, n] -> [pack*k, pack*n] block-diagonal replication (pack is tiny)."""
    if pack == 1:
        return w
    k, n = w.shape
    out = jnp.zeros((pack * k, pack * n), w.dtype)
    for p in range(pack):
        out = out.at[p * k:(p + 1) * k, p * n:(p + 1) * n].set(w)
    return out


def _mlp_kernel(x_ref, w1_ref, b1_ref, w2_ref, b2_ref, o_ref):
    # Cast the activations in VMEM (avoids a wrapper-side HBM pass and keeps
    # the DMA'd bytes at the input's native width).
    x = x_ref[...].astype(w1_ref.dtype)
    h = jnp.dot(x, w1_ref[...], preferred_element_type=jnp.float32) + b1_ref[...]
    # Exact GELU: 0.5 * h * (1 + erf(h / sqrt(2)))  (matches nn.GELU default).
    h = 0.5 * h * (1.0 + jax.lax.erf(h * (1.0 / math.sqrt(2.0))))
    y = jnp.dot(h.astype(w2_ref.dtype), w2_ref[...],
                preferred_element_type=jnp.float32) + b2_ref[...]
    o_ref[...] = y.astype(o_ref.dtype)


def template_angle_embedder(x, w1, b1, w2, b2, *, row_tile=8192):
    """x: [..., d_in] -> [..., d_out]; w1: [d_in, d_out], w2: [d_out, d_out]."""
    d_in = x.shape[-1]
    d_out = w1.shape[1]
    lead = x.shape[:-1]
    rows = math.prod(lead)  # math.prod(()) == 1
    dtype = w1.dtype

    # Lane-dense packing factor: fold `pack` consecutive rows into the 128-wide
    # lane dim — but never at the cost of padding/copying x.  128 % d_out == 0
    # implies d_out (and thus pack) is a power of two, so halving stays legal.
    pack = 128 // d_out if (d_out <= 128 and 128 % d_out == 0) else 1
    while pack > 1 and rows % pack != 0:
        pack //= 2

    prows = max(rows // pack, 1)       # packed rows (exact, no padding)
    kp = pack * d_in
    np_ = pack * d_out

    # Tile selection: big tiles amortize the ~0.35us per-grid-step overhead;
    # keep >= 2 steps when possible so v7x can shard across both TensorCores.
    ptile = _round_up(max(row_tile // pack, 8), 8)
    if prows >= 16:
        ptile = min(ptile, _round_up(-(-prows // 2), 8))
    else:
        ptile = prows                  # single full-extent block (always legal)
    grid_n = -(-prows // ptile)        # ragged last block -> masked DMA

    # Block-diagonal packed weights / tiled biases (exact: off-block zeros
    # contribute 0 in f32).  These are tiny and stay VMEM-resident.
    w1p = _block_diag(w1.astype(dtype), pack)
    w2p = _block_diag(w2.astype(dtype), pack)
    b1p = jnp.tile(b1.astype(dtype), pack).reshape(1, np_)
    b2p = jnp.tile(b2.astype(dtype), pack).reshape(1, np_)

    # Pure row-major view of x in its native dtype (free reshape, no copy).
    xp = x.reshape(prows, kp)

    # Explicit VMEM budget: double-buffered I/O tiles + resident weights,
    # clamped to a value that is safe on v5e/v6e (128 MiB) and v7x (64 MiB).
    isz = jnp.dtype(x.dtype).itemsize
    osz = jnp.dtype(dtype).itemsize
    vmem_bytes = (2 * ptile * (kp * isz + np_ * osz)
                  + (kp * np_ + np_ * np_ + 2 * np_) * osz + (2 << 20))
    vmem_limit = int(min(max(vmem_bytes, 32 << 20), 40 << 20))

    out = pl.pallas_call(
        _mlp_kernel,
        out_shape=jax.ShapeDtypeStruct((prows, np_), dtype),
        grid_spec=pltpu.PrefetchScalarGridSpec(
            num_scalar_prefetch=0,
            grid=(grid_n,),
            in_specs=[
                pl.BlockSpec((ptile, kp), lambda i: (i, 0)),
                pl.BlockSpec((kp, np_), lambda i: (0, 0)),
                pl.BlockSpec((1, np_), lambda i: (0, 0)),
                pl.BlockSpec((np_, np_), lambda i: (0, 0)),
                pl.BlockSpec((1, np_), lambda i: (0, 0)),
            ],
            out_specs=pl.BlockSpec((ptile, np_), lambda i: (i, 0)),
        ),
        compiler_params=pltpu.CompilerParams(
            dimension_semantics=("parallel",),
            vmem_limit_bytes=vmem_limit),
    )(xp, w1p, b1p, w2p, b2p)

    # Unpack lanes back to rows (free row-major reshape; no slicing needed
    # because prows * pack == rows exactly).
    return out.reshape(*lead, d_out)


def _reference(x, w1, b1, w2, b2):
    h = x.astype(w1.dtype) @ w1 + b1
    h = jax.nn.gelu(h, approximate=False)
    return h @ w2 + b2


if __name__ == "__main__":
    # Small shapes consistent with the module: [batch, n_templ, n_res, d_in].
    # rows = 2*3*7 = 42 -> packed rows = 21, grid of 2 with a ragged last
    # block, exercising the masked-DMA path.
    d_in, d_out = 57, 64
    batch, n_templ, n_res = 2, 3, 7

    key = jax.random.PRNGKey(0)
    kx, kw1, kb1, kw2, kb2 = jax.random.split(key, 5)

    x = jax.random.normal(kx, (batch, n_templ, n_res, d_in), dtype=jnp.float32)
    # He ("relu"-init) style weights, zero biases like Linear(init='relu').
    w1 = jax.random.normal(kw1, (d_in, d_out), dtype=jnp.float32) * math.sqrt(2.0 / d_in)
    b1 = jnp.zeros((d_out,), dtype=jnp.float32)
    w2 = jax.random.normal(kw2, (d_out, d_out), dtype=jnp.float32) * math.sqrt(2.0 / d_out)
    b2 = jnp.zeros((d_out,), dtype=jnp.float32)

    y = template_angle_embedder(x, w1, b1, w2, b2)
    y = jax.block_until_ready(y)

    y_ref = _reference(x, w1, b1, w2, b2)
    assert y.shape == (batch, n_templ, n_res, d_out)
    assert jnp.allclose(y, y_ref, atol=1e-4, rtol=1e-4)

    print("KERNEL_OK")
</pallas_src>

<mosaic_0001>
module attributes {stable_mosaic.version = 11 : i64} {
  func.func @_mlp_kernel(%arg0: i32, %arg1: memref<16x114xf32, #tpu.memory_space<vmem>>, %arg2: memref<114x128xf32, #tpu.memory_space<vmem>>, %arg3: memref<1x128xf32, #tpu.memory_space<vmem>>, %arg4: memref<128x128xf32, #tpu.memory_space<vmem>>, %arg5: memref<1x128xf32, #tpu.memory_space<vmem>>, %arg6: memref<16x128xf32, #tpu.memory_space<vmem>>) attributes {dimension_semantics = [#tpu.dimension_semantics<parallel>], iteration_bounds = array<i64: 2>, scalar_prefetch = 0 : i64, scratch_operands = 0 : i64, tpu.core_type = #tpu.core_type<tc>, window_params = [{transform_indices = @transform_0, window_bounds = array<i64: 16, 114>}, {pipeline_mode = #tpu.pipeline_mode<synchronous>, transform_indices = @transform_1, window_bounds = array<i64: 114, 128>}, {pipeline_mode = #tpu.pipeline_mode<synchronous>, transform_indices = @transform_2, window_bounds = array<i64: 1, 128>}, {pipeline_mode = #tpu.pipeline_mode<synchronous>, transform_indices = @transform_3, window_bounds = array<i64: 128, 128>}, {pipeline_mode = #tpu.pipeline_mode<synchronous>, transform_indices = @transform_4, window_bounds = array<i64: 1, 128>}, {transform_indices = @transform_5, window_bounds = array<i64: 16, 128>}]} {
    %c0 = arith.constant 0 : index
    %c0_0 = arith.constant 0 : index
    %0 = vector.load %arg1[%c0, %c0_0] : memref<16x114xf32, #tpu.memory_space<vmem>>, vector<16x114xf32>
    %c0_1 = arith.constant 0 : index
    %c0_2 = arith.constant 0 : index
    %1 = vector.load %arg2[%c0_1, %c0_2] : memref<114x128xf32, #tpu.memory_space<vmem>>, vector<114x128xf32>
    %cst = arith.constant dense<0.000000e+00> : vector<16x128xf32>
    %2 = tpu.matmul %0, %1, %cst {dimension_numbers = #tpu.dot_dimension_numbers<[1], [0], [0], [1], [0, 0, 1, 1], [], []>} : vector<16x114xf32>, vector<114x128xf32>, vector<16x128xf32> -> vector<16x128xf32>
    %c0_3 = arith.constant 0 : index
    %c0_4 = arith.constant 0 : index
    %3 = vector.load %arg3[%c0_3, %c0_4] : memref<1x128xf32, #tpu.memory_space<vmem>>, vector<1x128xf32>
    %4 = vector.broadcast %3 : vector<1x128xf32> to vector<16x128xf32>
    %5 = arith.addf %2, %4 : vector<16x128xf32>
    %cst_5 = arith.constant 5.000000e-01 : f32
    %6 = vector.broadcast %cst_5 : f32 to vector<16x128xf32>
    %7 = arith.mulf %6, %5 : vector<16x128xf32>
    %cst_6 = arith.constant 0.707106769 : f32
    %8 = vector.broadcast %cst_6 : f32 to vector<16x128xf32>
    %9 = arith.mulf %5, %8 : vector<16x128xf32>
    %10 = math.erf %9 : vector<16x128xf32>
    %cst_7 = arith.constant 1.000000e+00 : f32
    %11 = vector.broadcast %cst_7 : f32 to vector<16x128xf32>
    %12 = arith.addf %11, %10 : vector<16x128xf32>
    %13 = arith.mulf %7, %12 : vector<16x128xf32>
    %c0_8 = arith.constant 0 : index
    %c0_9 = arith.constant 0 : index
    %14 = vector.load %arg4[%c0_8, %c0_9] : memref<128x128xf32, #tpu.memory_space<vmem>>, vector<128x128xf32>
    %cst_10 = arith.constant dense<0.000000e+00> : vector<16x128xf32>
    %15 = tpu.matmul %13, %14, %cst_10 {dimension_numbers = #tpu.dot_dimension_numbers<[1], [0], [0], [1], [0, 0, 1, 1], [], []>} : vector<16x128xf32>, vector<128x128xf32>, vector<16x128xf32> -> vector<16x128xf32>
    %c0_11 = arith.constant 0 : index
    %c0_12 = arith.constant 0 : index
    %16 = vector.load %arg5[%c0_11, %c0_12] : memref<1x128xf32, #tpu.memory_space<vmem>>, vector<1x128xf32>
    %17 = vector.broadcast %16 : vector<1x128xf32> to vector<16x128xf32>
    %18 = arith.addf %15, %17 : vector<16x128xf32>
    %c0_13 = arith.constant 0 : index
    %c0_14 = arith.constant 0 : index
    %19 = vector.load %arg6[%c0_13, %c0_14] : memref<16x128xf32, #tpu.memory_space<vmem>>, vector<16x128xf32>
    tpu.vector_store %arg6[%c0_13, %c0_14], %18 {strides = array<i32>} : memref<16x128xf32, #tpu.memory_space<vmem>>, vector<16x128xf32>,
    return
  }
  func.func @transform_0(%arg0: i32) -> (i32, i32) {
    %c0_i32 = arith.constant 0 : i32
    %c0_i32_0 = arith.constant 0 : i32
    return %arg0, %c0_i32 : i32, i32
  }
  func.func @transform_1(%arg0: i32) -> (i32, i32) {
    %c0_i32 = arith.constant 0 : i32
    %c0_i32_0 = arith.constant 0 : i32
    %c0_i32_1 = arith.constant 0 : i32
    return %c0_i32, %c0_i32_0 : i32, i32
  }
  func.func @transform_2(%arg0: i32) -> (i32, i32) {
    %c0_i32 = arith.constant 0 : i32
    %c0_i32_0 = arith.constant 0 : i32
    %c0_i32_1 = arith.constant 0 : i32
    return %c0_i32, %c0_i32_0 : i32, i32
  }
  func.func @transform_3(%arg0: i32) -> (i32, i32) {
    %c0_i32 = arith.constant 0 : i32
    %c0_i32_0 = arith.constant 0 : i32
    %c0_i32_1 = arith.constant 0 : i32
    return %c0_i32, %c0_i32_0 : i32, i32
  }
  func.func @transform_4(%arg0: i32) -> (i32, i32) {
    %c0_i32 = arith.constant 0 : i32
    %c0_i32_0 = arith.constant 0 : i32
    %c0_i32_1 = arith.constant 0 : i32
    return %c0_i32, %c0_i32_0 : i32, i32
  }
  func.func @transform_5(%arg0: i32) -> (i32, i32) {
    %c0_i32 = arith.constant 0 : i32
    %c0_i32_0 = arith.constant 0 : i32
    return %arg0, %c0_i32 : i32, i32
  }
}

</mosaic_0001>

<llo_original>
// kernel: tpu_custom_call.1
$region0: #{tpu_custom_call.1}
  #allocation0 [shape = 'u32[]', space=smem, size = 0x4, offset = 0x4, fixed_abs, tag = 'smem constant byte address 0x4 - core index']
  #allocation1 [shape = 'u32[144,128]{1,0:T(1,128)}', space=vmem, size = 0x12000, scoped, tag = 'internal scratch']
  %s0 = inlined_call_operand.hbm [shape: f32[21,114], index: 0, kind: input, shape index: {}]
  %s1 = inlined_call_operand.hbm [shape: f32[114,128], index: 1, kind: input, shape index: {}]
  %s2 = inlined_call_operand.vmem [shape: f32[1,128], index: 2, kind: input, shape index: {}]
  %s3 = inlined_call_operand.hbm [shape: f32[128,128], index: 3, kind: input, shape index: {}]
  %s4 = inlined_call_operand.vmem [shape: f32[1,128], index: 4, kind: input, shape index: {}]
  %s5 = inlined_call_operand.hbm [shape: f32[21,128], index: 5, kind: output, shape index: {}]
  %s6 = sld [smem:[#allocation0]]
  $region65: #{tpu_custom_call.1} parent=0
    _
  %s8 = ssub.s32 1, %s6
  %s9 = scalar_select 0, %s8, %s6
  $region1: #{tpu_custom_call.1} parent=0
    #allocation2 [shape = 'u8[16384]{0}', space=vmem, size = 0x4000, scoped, tag = 'input window, operand 0']
    #allocation3 [shape = 's32[2]{0}', space=sflag, size = 0x8, scoped, tag = 'scoped memory for tpu_custom_call.1']
    #allocation4 [shape = 's32[2]{0}', space=sflag, size = 0x8, scoped, tag = 'scoped memory for tpu_custom_call.1']
    #allocation5 [shape = 'u8[61440]{0}', space=vmem, size = 0xf000, scoped, tag = 'input window, operand 1, single buffered']
    #allocation6 [shape = 's32[1]{0}', space=sflag, size = 0x4, scoped, tag = 'scoped memory for tpu_custom_call.1']
    #allocation7 [shape = 'u8[65536]{0}', space=vmem, size = 0x10000, scoped, tag = 'input window, operand 3, single buffered']
    #allocation8 [shape = 'u8[16384]{0}', space=vmem, size = 0x4000, scoped, tag = 'output window, operand 0']
    %10 = vsyncpa [#allocation3], 0
    %s11 = scalar_lea.sflag [#allocation3], 1
    %12 = vsyncpa %s11, 0
    %13 = vsyncpa [#allocation6], 0
    %14 = vsyncpa [#allocation4], 0
    %s15 = scalar_lea.sflag [#allocation4], 1
    %16 = vsyncpa %s15, 0
    loop: start=0, step=1, limit=4
    $region2: #{tpu_custom_call.1} parent=1 // loop_pre_header
      _
    $region3: #{tpu_custom_call.1} parent=1 // loop_header
      %s18 = sphi 0, %s22
      %p19 = scmp.ge.s32.totalorder %s18, 4
      %s28 = sphi 0, %s30
      %s31 = sphi 0, %s28
      %s32 = sphi 0, %s31
      %s48 = sphi 0, %s32
      %s52 = sphi 0, %s52
      %s54 = sphi 0, %s52
      %s55 = sphi 0, %s54
      %s69 = sphi 0, %s55
      %s73 = sphi 0, %s73
      %s75 = sphi 0, %s73
      %s76 = sphi 0, %s75
      %s90 = sphi 0, %s76
      %s94 = sphi 0, %s94
      %s96 = sphi 0, %s94
      %s97 = sphi 0, %s96
      %s111 = sphi 0, %s97
      %s115 = sphi 0, %s115
      %s117 = sphi 0, %s115
      %s118 = sphi 0, %s117
      %s132 = sphi 0, %s118
      %s138 = sphi 0, %s140
      %s141 = sphi 0, %s138
      %s142 = sphi 0, %s141
      %s158 = sphi 0, %s142
    $region4: #{tpu_custom_call.1} parent=1 // loop_header_branch
      %21 = sbr.rel (%p19) target = $region8
    $region5: #{tpu_custom_call.1} parent=1 // loop_body
      %s23 = ssub.s32 %s18, 1
      %s24 = ssub.s32 %s18, 2
      %s25 = sadd.s32 %s18, 1
      %s26 = ssub.s32 %s18, %s25
      %p27 = scmp.eq.s32.totalorder %s26, 0
      %s29 = sadd.s32 %s28, 1
      %s30 = scalar_select %p27, %s28, %s29
      %p33 = pneg %p27
      %p34 = scmp.eq.s32.totalorder %s18, 1
      %p35 = por %p33, %p34
      %p36 = scmp.ne.s32.totalorder %s28, %s31
      %p37 = scmp.eq.s32.totalorder %s18, 0
      %p38 = por %p36, %p37
      %p39 = scmp.ne.s32.totalorder %s28, %s31
      %p40 = scmp.eq.s32.totalorder %s23, 1
      %p41 = por %p39, %p40
      %p42 = scmp.ne.s32.totalorder %s31, %s32
      %p43 = scmp.eq.s32.totalorder %s23, 0
      %p44 = por %p42, %p43
      %p45 = scmp.ne.s32.totalorder %s31, %s32
      %p46 = scmp.eq.s32.totalorder %s24, 1
      %p47 = por %p45, %p46
      %p49 = scmp.ne.s32.totalorder %s32, %s48
      %p50 = scmp.eq.s32.totalorder %s24, 0
      %p51 = por %p49, %p50
      %s53 = sadd.s32 %s52, 1
      %p56 = scmp.eq.s32.totalorder %s18, 1
      %p57 = scmp.ne.s32.totalorder %s52, %s54
      %p58 = scmp.eq.s32.totalorder %s18, 0
      %p59 = por %p57, %p58
      %p60 = scmp.ne.s32.totalorder %s52, %s54
      %p61 = scmp.eq.s32.totalorder %s23, 1
      %p62 = por %p60, %p61
      %p63 = scmp.ne.s32.totalorder %s54, %s55
      %p64 = scmp.eq.s32.totalorder %s23, 0
      %p65 = por %p63, %p64
      %p66 = scmp.ne.s32.totalorder %s54, %s55
      %p67 = scmp.eq.s32.totalorder %s24, 1
      %p68 = por %p66, %p67
      %p70 = scmp.ne.s32.totalorder %s55, %s69
      %p71 = scmp.eq.s32.totalorder %s24, 0
      %p72 = por %p70, %p71
      %s74 = sadd.s32 %s73, 1
      %p77 = scmp.eq.s32.totalorder %s18, 1
      %p78 = scmp.ne.s32.totalorder %s73, %s75
      %p79 = scmp.eq.s32.totalorder %s18, 0
      %p80 = por %p78, %p79
      %p81 = scmp.ne.s32.totalorder %s73, %s75
      %p82 = scmp.eq.s32.totalorder %s23, 1
      %p83 = por %p81, %p82
      %p84 = scmp.ne.s32.totalorder %s75, %s76
      %p85 = scmp.eq.s32.totalorder %s23, 0
      %p86 = por %p84, %p85
      %p87 = scmp.ne.s32.totalorder %s75, %s76
      %p88 = scmp.eq.s32.totalorder %s24, 1
      %p89 = por %p87, %p88
      %p91 = scmp.ne.s32.totalorder %s76, %s90
      %p92 = scmp.eq.s32.totalorder %s24, 0
      %p93 = por %p91, %p92
      %s95 = sadd.s32 %s94, 1
      %p98 = scmp.eq.s32.totalorder %s18, 1
      %p99 = scmp.ne.s32.totalorder %s94, %s96
      %p100 = scmp.eq.s32.totalorder %s18, 0
      %p101 = por %p99, %p100
      %p102 = scmp.ne.s32.totalorder %s94, %s96
      %p103 = scmp.eq.s32.totalorder %s23, 1
      %p104 = por %p102, %p103
      %p105 = scmp.ne.s32.totalorder %s96, %s97
      %p106 = scmp.eq.s32.totalorder %s23, 0
      %p107 = por %p105, %p106
      %p108 = scmp.ne.s32.totalorder %s96, %s97
      %p109 = scmp.eq.s32.totalorder %s24, 1
      %p110 = por %p108, %p109
      %p112 = scmp.ne.s32.totalorder %s97, %s111
      %p113 = scmp.eq.s32.totalorder %s24, 0
      %p114 = por %p112, %p113
      %s116 = sadd.s32 %s115, 1
      %p119 = scmp.eq.s32.totalorder %s18, 1
      %p120 = scmp.ne.s32.totalorder %s115, %s117
      %p121 = scmp.eq.s32.totalorder %s18, 0
      %p122 = por %p120, %p121
      %p123 = scmp.ne.s32.totalorder %s115, %s117
      %p124 = scmp.eq.s32.totalorder %s23, 1
      %p125 = por %p123, %p124
      %p126 = scmp.ne.s32.totalorder %s117, %s118
      %p127 = scmp.eq.s32.totalorder %s23, 0
      %p128 = por %p126, %p127
      %p129 = scmp.ne.s32.totalorder %s117, %s118
      %p130 = scmp.eq.s32.totalorder %s24, 1
      %p131 = por %p129, %p130
      %p133 = scmp.ne.s32.totalorder %s118, %s132
      %p134 = scmp.eq.s32.totalorder %s24, 0
      %p135 = por %p133, %p134
      %s136 = ssub.s32 %s18, %s25
      %p137 = scmp.eq.s32.totalorder %s136, 0
      %s139 = sadd.s32 %s138, 1
      %s140 = scalar_select %p137, %s138, %s139
      %p143 = pneg %p137
      %p144 = scmp.eq.s32.totalorder %s18, 1
      %p145 = por %p143, %p144
      %p146 = scmp.ne.s32.totalorder %s138, %s141
      %p147 = scmp.eq.s32.totalorder %s18, 0
      %p148 = por %p146, %p147
      %p149 = scmp.ne.s32.totalorder %s138, %s141
      %p150 = scmp.eq.s32.totalorder %s23, 1
      %p151 = por %p149, %p150
      %p152 = scmp.ne.s32.totalorder %s141, %s142
      %p153 = scmp.eq.s32.totalorder %s23, 0
      %p154 = por %p152, %p153
      %p155 = scmp.ne.s32.totalorder %s141, %s142
      %p156 = scmp.eq.s32.totalorder %s24, 1
      %p157 = por %p155, %p156
      %p159 = scmp.ne.s32.totalorder %s142, %s158
      %p160 = scmp.eq.s32.totalorder %s24, 0
      %p161 = por %p159, %p160
      %p162 = scmp.le.s32.totalorder 1, %s18
      %p163 = scmp.lt.s32.totalorder %s18, 3
      %p164 = pnand %p162, %p163
      %p165 = pneg %p164
      // Predicated region
      $region9: #{tpu_custom_call.1} parent=5 // pred_check
        _
      $region10: #{tpu_custom_call.1} parent=5 // pred_check_branch
        %167 = sbr.rel (%p164) target = $region12
      $region11: #{tpu_custom_call.1} parent=5 // pred_region
        %s168 = ssub.s32 %s18, 1
        // Predicated region
        $region13: #{tpu_custom_call.1} parent=11 // pred_check
          %p169 = pneg %p65
        $region14: #{tpu_custom_call.1} parent=11 // pred_check_branch
          %171 = sbr.rel (%p169) target = $region16
        $region15: #{tpu_custom_call.1} parent=11 // pred_region
          %s173 = ssub.s32 1920, 1920
          %174 = vsyncadd [#allocation6], %s173
          %s175 = sshll.u32 [#allocation5], 4
          %s176 = int_to_ptr.vmem [resolvable:$true] %s175
          %181 = dma.hbm_to_vmem [thread:$0]  %s1, 1920, %s176, [#allocation6], 128, 128, 8
        $region16: #{tpu_custom_call.1} parent=11 // pred_fallthru
          _
        // Predicated region
        $region17: #{tpu_custom_call.1} parent=11 // pred_check
          %p182 = pneg %p86
        $region18: #{tpu_custom_call.1} parent=11 // pred_check_branch
          %184 = sbr.rel (%p182) target = $region20
        $region19: #{tpu_custom_call.1} parent=11 // pred_region
          _
        $region20: #{tpu_custom_call.1} parent=11 // pred_fallthru
          _
        // Predicated region
        $region21: #{tpu_custom_call.1} parent=11 // pred_check
          %p185 = pneg %p107
        $region22: #{tpu_custom_call.1} parent=11 // pred_check_branch
          %187 = sbr.rel (%p185) target = $region24
        $region23: #{tpu_custom_call.1} parent=11 // pred_region
          %s189 = ssub.s32 2048, 2048
          %190 = vsyncadd [#allocation6], %s189
          %s191 = sshll.u32 [#allocation7], 4
          %s192 = int_to_ptr.vmem [resolvable:$true] %s191
          %197 = dma.hbm_to_vmem [thread:$0]  %s3, 2048, %s192, [#allocation6], 128, 128, 8
        $region24: #{tpu_custom_call.1} parent=11 // pred_fallthru
          _
        // Predicated region
        $region25: #{tpu_custom_call.1} parent=11 // pred_check
          %p198 = pneg %p128
        $region26: #{tpu_custom_call.1} parent=11 // pred_check_branch
          %200 = sbr.rel (%p198) target = $region28
        $region27: #{tpu_custom_call.1} parent=11 // pred_region
          _
        $region28: #{tpu_custom_call.1} parent=11 // pred_fallthru
          _
      $region12: #{tpu_custom_call.1} parent=5 // pred_fallthru
        _
      %p201 = scmp.lt.s32.totalorder %s18, 2
      // Predicated region
      $region29: #{tpu_custom_call.1} parent=5 // pred_check
        %p202 = pneg %p201
      $region30: #{tpu_custom_call.1} parent=5 // pred_check_branch
        %204 = sbr.rel (%p202) target = $region32
      $region31: #{tpu_custom_call.1} parent=5 // pred_region
        // Predicated region
        $region33: #{tpu_custom_call.1} parent=31 // pred_check
          %p205 = pneg %p38
        $region34: #{tpu_custom_call.1} parent=31 // pred_check_branch
          %207 = sbr.rel (%p205) target = $region36
        $region35: #{tpu_custom_call.1} parent=31 // pred_region
          %s208 = sand.u32 %s28, 1
          %s209 = scalar_lea.sflag [#allocation3], %s208
          %s210 = sand.u32 %s28, 1
          %s211 = smul.addr %s210, 16
          %s212 = scalar_lea.vmem [#allocation2], %s211
          %s213 = smul.u32 2, %s18
          %s214 = ssub.s32 3, %s213
          %p215 = scmp.lt.s32.totalorder %s214, 2
          %s216 = scalar_select %p215, %s214, 2
          %s217 = smul.u32 128, %s216
          %s219 = ssub.s32 256, %s217
          %220 = vsyncadd %s209, %s219
          %p221 = scmp.ne.s32.totalorder 0, %s217
          %s222 = smul.addr %s213, 128
          %s223 = scalar_lea.hbm %s0, %s222
          %s224 = smul.u32 8, %s216
          %s225 = sshll.u32 %s212, 4
          %s226 = int_to_ptr.vmem [resolvable:$true] %s225
          %s227 = sshll.u32 %s224, 4
          %231 = dma.hbm_to_vmem [thread:$0]  (%p221), %s223, %s227, %s226, %s209, 128, 128, 8
        $region36: #{tpu_custom_call.1} parent=31 // pred_fallthru
          _
      $region32: #{tpu_custom_call.1} parent=5 // pred_fallthru
        _
      %p232 = scmp.le.s32.totalorder 1, %s18
      %p233 = scmp.lt.s32.totalorder %s18, 3
      %p234 = pnand %p232, %p233
      %p235 = pneg %p234
      // Predicated region
      $region37: #{tpu_custom_call.1} parent=5 // pred_check
        _
      $region38: #{tpu_custom_call.1} parent=5 // pred_check_branch
        %237 = sbr.rel (%p234) target = $region40
      $region39: #{tpu_custom_call.1} parent=5 // pred_region
        %s238 = ssub.s32 %s18, 1
        %s239 = sand.u32 %s31, 1
        %s240 = scalar_lea.sflag [#allocation3], %s239
        %s241 = sand.u32 %s31, 1
        %s242 = smul.addr %s241, 16
        %s243 = scalar_lea.vmem [#allocation2], %s242
        // Predicated region
        $region41: #{tpu_custom_call.1} parent=39 // pred_check
          %p244 = pneg %p44
        $region42: #{tpu_custom_call.1} parent=39 // pred_check_branch
          %246 = sbr.rel (%p244) target = $region44
        $region43: #{tpu_custom_call.1} parent=39 // pred_region
          %247 = dma.done %s240, 256
        $region44: #{tpu_custom_call.1} parent=39 // pred_fallthru
          _
        // Predicated region
        $region45: #{tpu_custom_call.1} parent=39 // pred_check
          %p248 = pneg %p65
        $region46: #{tpu_custom_call.1} parent=39 // pred_check_branch
          %250 = sbr.rel (%p248) target = $region48
        $region47: #{tpu_custom_call.1} parent=39 // pred_region
          %251 = dma.done [#allocation6], 1920
        $region48: #{tpu_custom_call.1} parent=39 // pred_fallthru
          _
        // Predicated region
        $region49: #{tpu_custom_call.1} parent=39 // pred_check
          %p252 = pneg %p107
        $region50: #{tpu_custom_call.1} parent=39 // pred_check_branch
          %254 = sbr.rel (%p252) target = $region52
        $region51: #{tpu_custom_call.1} parent=39 // pred_region
          %255 = dma.done [#allocation6], 2048
        $region52: #{tpu_custom_call.1} parent=39 // pred_fallthru
          _
        %s256 = sand.u32 %s31, 1
        %s257 = scalar_lea.sflag [#allocation3], %s256
        %s258 = sand.u32 %s31, 1
        %s259 = smul.addr %s258, 16
        %s260 = scalar_lea.vmem [#allocation2], %s259
        %p261 = pneg %p44
        %p262 = pneg %p41
        %p263 = pneg %p65
        %p264 = pneg %p62
        %p265 = pneg %p86
        %p266 = pneg %p83
        %p267 = pneg %p107
        %p268 = pneg %p104
        %p269 = pneg %p128
        %p270 = pneg %p125
        %p271 = pneg %p154
        %p272 = pneg %p151
        %s273 = sand.u32 %s141, 1
        %s274 = scalar_lea.sflag [#allocation4], %s273
        %s275 = sand.u32 %s141, 1
        %s276 = smul.addr %s275, 16
        %s277 = scalar_lea.vmem [#allocation8], %s276
        %s278 = smul.u32 2, %s23
        %s279 = ssub.s32 3, %s278
        %p280 = scmp.lt.s32.totalorder %s279, 2
        %s281 = scalar_select %p280, %s279, 2
        %s282 = smul.u32 128, %s281
        %s283 = smul.u32 2, %s23
        %s284 = ssub.s32 3, %s283
        %p285 = scmp.lt.s32.totalorder %s284, 2
        %s286 = scalar_select %p285, %s284, 2
        %s287 = smul.u32 128, %s286
        %v288 = vld [vmem:[%s243] sm:$0xff]
        %v289 = vld [vmem:[%s243 + $0x8] sm:$0xff]
        %v290 = vld [vmem:[#allocation5] sm:$0xff]
        %v291 = vld [vmem:[#allocation5 + $0x8] sm:$0xff]
        %v292 = vld [vmem:[#allocation5 + $0x10] sm:$0xff]
        %v293 = vld [vmem:[#allocation5 + $0x18] sm:$0xff]
        %v294 = vld [vmem:[#allocation5 + $0x20] sm:$0xff]
        %v295 = vld [vmem:[#allocation5 + $0x28] sm:$0xff]
        %v296 = vld [vmem:[#allocation5 + $0x30] sm:$0xff]
        %v297 = vld [vmem:[#allocation5 + $0x38] sm:$0xff]
        %v298 = vld [vmem:[#allocation5 + $0x40] sm:$0xff]
        %v299 = vld [vmem:[#allocation5 + $0x48] sm:$0xff]
        %v300 = vld [vmem:[#allocation5 + $0x50] sm:$0xff]
        %v301 = vld [vmem:[#allocation5 + $0x58] sm:$0xff]
        %v302 = vld [vmem:[#allocation5 + $0x60] sm:$0xff]
        %v303 = vld [vmem:[#allocation5 + $0x68] sm:$0xff]
        %v304 = vld [vmem:[#allocation5 + $0x70] sm:$0x3]
        %v305 = vld [vmem:[%s2] sm:$0x1]
        %v307 = vlaneseq
        %v308 = vshrl.u32 %v307, 7
        %v309 = vsub.s32 0, %v308
        %v310 = vrot.slane %v305, %v309
        %vm312 = vcmask 932864
        %v314 = vsel %vm312, %v288, 0
        %v317 = vsel %vm312, %v289, 0
        %vm319 = vcmask 1041408
        %v321 = vsel %vm319, %v304, 0
        %323 = vmatprep.subr.mxu0 0.0
        %324 = vmatpush1.msra.mxu0 %v290
        %325 = vmatprep.subr.mxu0 0.0
        %326 = vmatpush1.msra.mxu0 %v291
        %327 = vmatprep.subr.mxu0 0.0
        %328 = vmatpush1.msra.mxu0 %v292
        %329 = vmatprep.subr.mxu0 0.0
        %330 = vmatpush1.msra.mxu0 %v293
        %331 = vmatprep.subr.mxu0 0.0
        %332 = vmatpush1.msra.mxu0 %v294
        %333 = vmatprep.subr.mxu0 0.0
        %334 = vmatpush1.msra.mxu0 %v295
        %335 = vmatprep.subr.mxu0 0.0
        %336 = vmatpush1.msra.mxu0 %v296
        %337 = vmatprep.subr.mxu0 0.0
        %338 = vmatpush1.msra.mxu0 %v297
        %339 = vmatprep.subr.mxu0 0.0
        %340 = vmatpush1.msra.mxu0 %v298
        %341 = vmatprep.subr.mxu0 0.0
        %342 = vmatpush1.msra.mxu0 %v299
        %343 = vmatprep.subr.mxu0 0.0
        %344 = vmatpush1.msra.mxu0 %v300
        %345 = vmatprep.subr.mxu0 0.0
        %346 = vmatpush1.msra.mxu0 %v301
        %347 = vmatprep.subr.mxu0 0.0
        %348 = vmatpush1.msra.mxu0 %v302
        %349 = vmatprep.subr.mxu0 0.0
        %350 = vmatpush1.msra.mxu0 %v303
        %351 = vmatprep.subr.mxu0 0.0
        %352 = vmatpush1.msra.mxu0 %v321
        %353 = vmatprep.subr.mxu0 0.0
        %354 = vmatpush1.msra.mxu0 0.0
        %355 = vmatprep.subr.mxu0 0.0
        %356 = vmatpush1.msra.mxu0 0.0
        %357 = vmatprep.subr.mxu0 0.0
        %358 = vmatpush1.msra.mxu0 0.0
        %359 = vmatprep.subr.mxu0 0.0
        %360 = vmatpush1.msra.mxu0 0.0
        %361 = vmatprep.subr.mxu0 0.0
        %362 = vmatpush1.msra.mxu0 0.0
        %363 = vmatprep.subr.mxu0 0.0
        %364 = vmatpush1.msra.mxu0 0.0
        %365 = vmatprep.subr.mxu0 0.0
        %366 = vmatpush1.msra.mxu0 0.0
        %367 = vmatprep.subr.mxu0 0.0
        %368 = vmatpush1.msra.mxu0 0.0
        %369 = vmatprep.subr.mxu0 0.0
        %370 = vmatpush1.msra.mxu0 0.0
        %371 = vmatprep.subr.mxu0 0.0
        %372 = vmatpush1.msra.mxu0 0.0
        %373 = vmatprep.subr.mxu0 0.0
        %374 = vmatpush1.msra.mxu0 0.0
        %375 = vmatprep.subr.mxu0 0.0
        %376 = vmatpush1.msra.mxu0 0.0
        %377 = vmatprep.subr.mxu0 0.0
        %378 = vmatpush1.msra.mxu0 0.0
        %379 = vmatprep.subr.mxu0 0.0
        %380 = vmatpush1.msra.mxu0 0.0
        %381 = vmatprep.subr.mxu0 0.0
        %382 = vmatpush1.msra.mxu0 0.0
        %383 = vmatprep.subr.mxu0 0.0
        %384 = vmatpush1.msra.mxu0 0.0
        %385 = vmatprep.subr.mxu0 0.0
        %386 = vmatpush1.msra.mxu0 0.0
        %387 = vmatprep.mubr.f32.mxu0 0.0
        %388 = vmatmul.mubr.f32.gmra.mrb[0].mxu0 %v314
        %v389 = vpop.f32.mrb[0].mxu0
        %v390 = vadd.f32 %v310, %v389
        %v391 = vpop.f32.mrb[0].mxu0
        %392 = vmatprep.mubr.f32.mxu0 0.0
        %393 = vmatmul.mubr.f32.gmra.mrb[0].mxu0 %v317
        %v394 = vpop.f32.mrb[0].mxu0
        %v395 = vadd.f32 %v310, %v394
        %v396 = vpop.f32.mrb[0].mxu0
        %397 = vdwg.mxu0
        %v398 = vmul.f32 %v390, 0.5
        %v399 = vmul.f32 %v395, 0.5
        %v400 = vmul.f32 %v390, 0.70710677
        %v401 = vmul.f32 %v395, 0.70710677
        %v402 = verf.f32.pop %v400
        %v403 = verf.f32.pop %v401
        %v404 = vadd.f32 %v402, 1.0
        %v405 = vadd.f32 %v403, 1.0
        %v406 = vmul.f32 %v398, %v404
        %v407 = vmul.f32 %v399, %v405
        %v408 = vld [vmem:[#allocation7] sm:$0xff]
        %v409 = vld [vmem:[#allocation7 + $0x8] sm:$0xff]
        %v410 = vld [vmem:[#allocation7 + $0x10] sm:$0xff]
        %v411 = vld [vmem:[#allocation7 + $0x18] sm:$0xff]
        %v412 = vld [vmem:[#allocation7 + $0x20] sm:$0xff]
        %v413 = vld [vmem:[#allocation7 + $0x28] sm:$0xff]
        %v414 = vld [vmem:[#allocation7 + $0x30] sm:$0xff]
        %v415 = vld [vmem:[#allocation7 + $0x38] sm:$0xff]
        %v416 = vld [vmem:[#allocation7 + $0x40] sm:$0xff]
        %v417 = vld [vmem:[#allocation7 + $0x48] sm:$0xff]
        %v418 = vld [vmem:[#allocation7 + $0x50] sm:$0xff]
        %v419 = vld [vmem:[#allocation7 + $0x58] sm:$0xff]
        %v420 = vld [vmem:[#allocation7 + $0x60] sm:$0xff]
        %v421 = vld [vmem:[#allocation7 + $0x68] sm:$0xff]
        %v422 = vld [vmem:[#allocation7 + $0x70] sm:$0xff]
        %v423 = vld [vmem:[#allocation7 + $0x78] sm:$0xff]
        %v424 = vld [vmem:[%s4] sm:$0x1]
        %v426 = vlaneseq
        %v427 = vshrl.u32 %v426, 7
        %v428 = vsub.s32 0, %v427
        %v429 = vrot.slane %v424, %v428
        %431 = vmatprep.subr.mxu0 0.0
        %432 = vmatpush1.msra.mxu0 %v408
        %433 = vmatprep.subr.mxu0 0.0
        %434 = vmatpush1.msra.mxu0 %v409
        %435 = vmatprep.subr.mxu0 0.0
        %436 = vmatpush1.msra.mxu0 %v410
        %437 = vmatprep.subr.mxu0 0.0
        %438 = vmatpush1.msra.mxu0 %v411
        %439 = vmatprep.subr.mxu0 0.0
        %440 = vmatpush1.msra.mxu0 %v412
        %441 = vmatprep.subr.mxu0 0.0
        %442 = vmatpush1.msra.mxu0 %v413
        %443 = vmatprep.subr.mxu0 0.0
        %444 = vmatpush1.msra.mxu0 %v414
        %445 = vmatprep.subr.mxu0 0.0
        %446 = vmatpush1.msra.mxu0 %v415
        %447 = vmatprep.subr.mxu0 0.0
        %448 = vmatpush1.msra.mxu0 %v416
        %449 = vmatprep.subr.mxu0 0.0
        %450 = vmatpush1.msra.mxu0 %v417
        %451 = vmatprep.subr.mxu0 0.0
        %452 = vmatpush1.msra.mxu0 %v418
        %453 = vmatprep.subr.mxu0 0.0
        %454 = vmatpush1.msra.mxu0 %v419
        %455 = vmatprep.subr.mxu0 0.0
        %456 = vmatpush1.msra.mxu0 %v420
        %457 = vmatprep.subr.mxu0 0.0
        %458 = vmatpush1.msra.mxu0 %v421
        %459 = vmatprep.subr.mxu0 0.0
        %460 = vmatpush1.msra.mxu0 %v422
        %461 = vmatprep.subr.mxu0 0.0
        %462 = vmatpush1.msra.mxu0 %v423
        %463 = vmatprep.subr.mxu0 0.0
        %464 = vmatpush1.msra.mxu0 0.0
        %465 = vmatprep.subr.mxu0 0.0
        %466 = vmatpush1.msra.mxu0 0.0
        %467 = vmatprep.subr.mxu0 0.0
        %468 = vmatpush1.msra.mxu0 0.0
        %469 = vmatprep.subr.mxu0 0.0
        %470 = vmatpush1.msra.mxu0 0.0
        %471 = vmatprep.subr.mxu0 0.0
        %472 = vmatpush1.msra.mxu0 0.0
        %473 = vmatprep.subr.mxu0 0.0
        %474 = vmatpush1.msra.mxu0 0.0
        %475 = vmatprep.subr.mxu0 0.0
        %476 = vmatpush1.msra.mxu0 0.0
        %477 = vmatprep.subr.mxu0 0.0
        %478 = vmatpush1.msra.mxu0 0.0
        %479 = vmatprep.subr.mxu0 0.0
        %480 = vmatpush1.msra.mxu0 0.0
        %481 = vmatprep.subr.mxu0 0.0
        %482 = vmatpush1.msra.mxu0 0.0
        %483 = vmatprep.subr.mxu0 0.0
        %484 = vmatpush1.msra.mxu0 0.0
        %485 = vmatprep.subr.mxu0 0.0
        %486 = vmatpush1.msra.mxu0 0.0
        %487 = vmatprep.subr.mxu0 0.0
        %488 = vmatpush1.msra.mxu0 0.0
        %489 = vmatprep.subr.mxu0 0.0
        %490 = vmatpush1.msra.mxu0 0.0
        %491 = vmatprep.subr.mxu0 0.0
        %492 = vmatpush1.msra.mxu0 0.0
        %493 = vmatprep.subr.mxu0 0.0
        %494 = vmatpush1.msra.mxu0 0.0
        %495 = vmatprep.mubr.f32.mxu0 0.0
        %496 = vmatmul.mubr.f32.gmra.mrb[0].mxu0 %v406
        %v497 = vpop.f32.mrb[0].mxu0
        %v498 = vadd.f32 %v429, %v497
        %v499 = vpop.f32.mrb[0].mxu0
        %500 = vmatprep.mubr.f32.mxu0 0.0
        %501 = vmatmul.mubr.f32.gmra.mrb[0].mxu0 %v407
        %v502 = vpop.f32.mrb[0].mxu0
        %v503 = vadd.f32 %v429, %v502
        %v504 = vpop.f32.mrb[0].mxu0
        %505 = vdwg.mxu0
        %506 = vst [vmem:[%s277] sm:$0xff] %v498
        %507 = vst [vmem:[%s277 + $0x8] sm:$0xff] %v503
        %s508 = sand.u32 %s141, 1
        %s509 = scalar_lea.sflag [#allocation4], %s508
        %s510 = sand.u32 %s141, 1
        %s511 = smul.addr %s510, 16
        %s512 = scalar_lea.vmem [#allocation8], %s511
        // Predicated region
        $region53: #{tpu_custom_call.1} parent=39 // pred_check
          %p513 = pneg %p151
        $region54: #{tpu_custom_call.1} parent=39 // pred_check_branch
          %515 = sbr.rel (%p513) target = $region56
        $region55: #{tpu_custom_call.1} parent=39 // pred_region
          %s516 = smul.u32 2, %s23
          %s517 = ssub.s32 3, %s516
          %p518 = scmp.lt.s32.totalorder %s517, 2
          %s519 = scalar_select %p518, %s517, 2
          %s520 = smul.u32 128, %s519
          %s522 = ssub.s32 256, %s520
          %523 = vsyncadd %s509, %s522
          %p524 = scmp.ne.s32.totalorder 0, %s520
          %s525 = smul.addr %s516, 128
          %s526 = scalar_lea.hbm %s5, %s525
          %s527 = smul.u32 8, %s519
          %s528 = sshll.u32 %s512, 4
          %s529 = int_to_ptr.vmem [resolvable:$true] %s528
          %s530 = sshll.u32 %s527, 4
          %534 = dma.vmem_to_hbm [thread:$0]  (%p524), %s529, %s530, %s526, %s509, 128, 128, 8
        $region56: #{tpu_custom_call.1} parent=39 // pred_fallthru
          _
      $region40: #{tpu_custom_call.1} parent=5 // pred_fallthru
        _
      %p535 = scmp.le.s32.totalorder 2, %s18
      // Predicated region
      $region57: #{tpu_custom_call.1} parent=5 // pred_check
        %p536 = pneg %p535
      $region58: #{tpu_custom_call.1} parent=5 // pred_check_branch
        %538 = sbr.rel (%p536) target = $region60
      $region59: #{tpu_custom_call.1} parent=5 // pred_region
        %s539 = ssub.s32 %s18, 2
        // Predicated region
        $region61: #{tpu_custom_call.1} parent=59 // pred_check
          %p540 = pneg %p157
        $region62: #{tpu_custom_call.1} parent=59 // pred_check_branch
          %542 = sbr.rel (%p540) target = $region64
        $region63: #{tpu_custom_call.1} parent=59 // pred_region
          %s543 = sand.u32 %s142, 1
          %s544 = scalar_lea.sflag [#allocation4], %s543
          %s545 = sand.u32 %s142, 1
          %s546 = smul.addr %s545, 16
          %s547 = scalar_lea.vmem [#allocation8], %s546
          %548 = dma.done %s544, 256
        $region64: #{tpu_custom_call.1} parent=59 // pred_fallthru
          _
      $region60: #{tpu_custom_call.1} parent=5 // pred_fallthru
        _
    $region6: #{tpu_custom_call.1} parent=1 // loop_footer
      %s22 = sadd.s32 1, %s18
    $region7: #{tpu_custom_call.1} parent=1 // loop_footer_branch
      %17 = sbr.rel target = $region3
    $region8: #{tpu_custom_call.1} parent=1 // loop_exit
      _
    %549 = vsyncpa [#allocation3], 1
    %s550 = scalar_lea.sflag [#allocation3], 1
    %551 = vsyncpa %s550, 1
    %552 = vsyncpa [#allocation6], 1
    %553 = vsyncpa [#allocation4], 1
    %s554 = scalar_lea.sflag [#allocation4], 1
    %555 = vsyncpa %s554, 1

</llo_original>
